<compile_context>
chip_gen: v7x
topology: tpu7x:2x2x1
jax: 0.10.0
libtpu: 0.0.40
codegen_flags: <defaults>
</compile_context>

<pallas_src>
from math import sqrt
import functools

import jax
import jax.numpy as jnp
from jax.experimental import pallas as pl
from jax.experimental.pallas import tpu as pltpu

_LANE = 128      # vreg lane width
_SUBLANE = 8     # vreg sublane count (f32)


def _round_up(x, m):
    return ((x + m - 1) // m) * m


def _mlp_kernel(x_ref, *refs, activation):
    """Fused MLP: chained (matmul + bias) on one lane-padded batch tile.

    refs = (w0, b0, w1, b1, ..., w_{L-1}, b_{L-1}, out_ref).
    Weights/biases are grid-invariant (resident every step); all feature dims
    are pre-padded to multiples of 128.
    """
    out_ref = refs[-1]
    params = refs[:-1]
    n_layers = len(params) // 2

    h = x_ref[...]                                         # f32 [tile_b, K0_pad]
    for l in range(n_layers):
        w = params[2 * l][...]                             # bf16 [K_pad, N_pad]
        b = params[2 * l + 1][...]                         # f32  [1, N_pad]
        h = jnp.dot(h.astype(w.dtype), w,
                    preferred_element_type=jnp.float32) + b
    if activation is not None:
        h = activation(h)                                  # EUP-fused (free slot)
    # dropout_rate == 0.0 -> identity (module default).
    # TODO(synk): nonzero dropout would need pltpu.prng_seed/prng_random_bits + mask.
    out_ref[...] = h.astype(out_ref.dtype)


def mlp_forward(x, weights, biases, *, activation=None,
                param_dtype=jnp.bfloat16, max_tile_b=256):
    """Run the fused MLP Pallas kernel.

    x:       [B, input_size]        (any float dtype, computed in f32/bf16)
    weights: list of [d_in, d_out]  float32
    biases:  list of [d_out]        float32
    Returns  [B, output_size]       float32
    """
    B, d_in = x.shape
    out_dim = weights[-1].shape[1]

    # ---- host-side padding: lane-dense features, sublane-aligned batch ----
    d_in_p = _round_up(d_in, _LANE)
    tile_b = min(max_tile_b, _round_up(B, _SUBLANE))
    B_p = _round_up(B, tile_b)
    x_p = jnp.pad(x.astype(jnp.float32),
                  ((0, B_p - B), (0, d_in_p - d_in)))

    param_args, param_specs = [], []
    cur_in_p = d_in_p
    for w, b in zip(weights, biases):
        k, n = w.shape
        n_p = _round_up(n, _LANE)
        w_p = jnp.pad(w, ((0, cur_in_p - k), (0, n_p - n))).astype(param_dtype)
        b_p = jnp.pad(b.reshape(1, -1).astype(jnp.float32),
                      ((0, 0), (0, n_p - n)))
        param_args += [w_p, b_p]
        # Full-array blocks, constant index_map -> weights stay VMEM-resident.
        # TODO(synk): for large scaled configs on v7x (64 MiB VMEM), add
        # pipeline_mode=pl.Buffered(1) here (blocks are grid-invariant) or set
        # vmem_limit_bytes to avoid double-buffering the whole weight set.
        param_specs += [
            pl.BlockSpec(w_p.shape, lambda i: (0, 0)),
            pl.BlockSpec(b_p.shape, lambda i: (0, 0)),
        ]
        cur_in_p = n_p
    out_dim_p = cur_in_p

    grid = (B_p // tile_b,)
    kernel = functools.partial(_mlp_kernel, activation=activation)

    out_p = pl.pallas_call(
        kernel,
        out_shape=jax.ShapeDtypeStruct((B_p, out_dim_p), jnp.float32),
        grid=grid,
        in_specs=[pl.BlockSpec((tile_b, d_in_p), lambda i: (i, 0))] + param_specs,
        out_specs=pl.BlockSpec((tile_b, out_dim_p), lambda i: (i, 0)),
        compiler_params=pltpu.CompilerParams(
            dimension_semantics=("parallel",),   # batch axis -> both v7x TCs
        ),
    )(x_p, *param_args)

    return out_p[:B, :out_dim]


def init_params(key, input_size, hidden_sizes, output_size):
    """Init mirroring the PyTorch module: uniform(-1/sqrt(input_size), +...),
    and hidden_sizes[0] skipped (hidden_sizes[1:])."""
    std = 1.0 / sqrt(input_size)
    layer_dims = []
    current_in = input_size
    for layer_size in hidden_sizes[1:]:
        layer_dims.append((current_in, layer_size))
        current_in = layer_size
    layer_dims.append((current_in, output_size))

    weights, biases = [], []
    for (d_in, d_out) in layer_dims:
        key, kw, kb = jax.random.split(key, 3)
        weights.append(jax.random.uniform(kw, (d_in, d_out), jnp.float32, -std, std))
        biases.append(jax.random.uniform(kb, (d_out,), jnp.float32, -std, std))
    return weights, biases


def reference_forward(x, weights, biases, *, activation=None,
                      param_dtype=jnp.bfloat16):
    """Pure-JAX reference mirroring the kernel's numeric path
    (bf16 operands, f32 accumulate)."""
    h = x.astype(jnp.float32)
    for w, b in zip(weights, biases):
        h = jnp.dot(h.astype(param_dtype), w.astype(param_dtype),
                    preferred_element_type=jnp.float32) + b.astype(jnp.float32)
    if activation is not None:
        h = activation(h)
    return h


def reference_forward_f32(x, weights, biases, *, activation=None):
    """Full-f32 reference (module semantics exactly)."""
    h = x.astype(jnp.float32)
    for w, b in zip(weights, biases):
        h = jnp.matmul(h, w) + b
    if activation is not None:
        h = activation(h)
    return h


if __name__ == "__main__":
    # Config: input_size=16, hidden_size=[64, 32, 32], output_size=8
    # (layers actually built: 16->32, 32->32, 32->8; hidden_size[0] skipped)
    input_size = 16
    hidden_sizes = [64, 32, 32]
    output_size = 8
    batch = 16

    key = jax.random.PRNGKey(0)
    key, kx = jax.random.split(key)
    x = jax.random.normal(kx, (batch, input_size), jnp.float32)

    weights, biases = init_params(key, input_size, hidden_sizes, output_size)

    out = mlp_forward(x, weights, biases)           # one grid step, lane-padded
    out = jax.block_until_ready(out)
    assert out.shape == (batch, output_size)

    # Tight check against a reference with the identical bf16/f32 numeric path.
    ref_bf16 = reference_forward(x, weights, biases)
    assert jnp.allclose(out, ref_bf16, atol=1e-4, rtol=1e-4), \
        "mismatch vs mirrored (bf16-operand) reference"

    # Loose check against the exact f32 module semantics (bf16 cast tolerance).
    ref_f32 = reference_forward_f32(x, weights, biases)
    assert jnp.allclose(out, ref_f32, atol=5e-2, rtol=5e-2), \
        "mismatch vs full-f32 reference"

    print("KERNEL_OK")
</pallas_src>

<mosaic_0001>
module attributes {stable_mosaic.version = 11 : i64} {
  func.func @_mlp_kernel(%arg0: i32, %arg1: memref<16x128xf32, #tpu.memory_space<vmem>>, %arg2: memref<128x128xbf16, #tpu.memory_space<vmem>>, %arg3: memref<1x128xf32, #tpu.memory_space<vmem>>, %arg4: memref<128x128xbf16, #tpu.memory_space<vmem>>, %arg5: memref<1x128xf32, #tpu.memory_space<vmem>>, %arg6: memref<128x128xbf16, #tpu.memory_space<vmem>>, %arg7: memref<1x128xf32, #tpu.memory_space<vmem>>, %arg8: memref<16x128xf32, #tpu.memory_space<vmem>>) attributes {dimension_semantics = [#tpu.dimension_semantics<parallel>], iteration_bounds = array<i64: 1>, scalar_prefetch = 0 : i64, scratch_operands = 0 : i64, tpu.core_type = #tpu.core_type<tc>, window_params = [{transform_indices = @transform_0, window_bounds = array<i64: 16, 128>}, {pipeline_mode = #tpu.pipeline_mode<synchronous>, transform_indices = @transform_1, window_bounds = array<i64: 128, 128>}, {pipeline_mode = #tpu.pipeline_mode<synchronous>, transform_indices = @transform_2, window_bounds = array<i64: 1, 128>}, {pipeline_mode = #tpu.pipeline_mode<synchronous>, transform_indices = @transform_3, window_bounds = array<i64: 128, 128>}, {pipeline_mode = #tpu.pipeline_mode<synchronous>, transform_indices = @transform_4, window_bounds = array<i64: 1, 128>}, {pipeline_mode = #tpu.pipeline_mode<synchronous>, transform_indices = @transform_5, window_bounds = array<i64: 128, 128>}, {pipeline_mode = #tpu.pipeline_mode<synchronous>, transform_indices = @transform_6, window_bounds = array<i64: 1, 128>}, {transform_indices = @transform_7, window_bounds = array<i64: 16, 128>}]} {
    %c0 = arith.constant 0 : index
    %c0_0 = arith.constant 0 : index
    %0 = vector.load %arg1[%c0, %c0_0] : memref<16x128xf32, #tpu.memory_space<vmem>>, vector<16x128xf32>
    %c0_1 = arith.constant 0 : index
    %c0_2 = arith.constant 0 : index
    %1 = vector.load %arg2[%c0_1, %c0_2] : memref<128x128xbf16, #tpu.memory_space<vmem>>, vector<128x128xbf16>
    %c0_3 = arith.constant 0 : index
    %c0_4 = arith.constant 0 : index
    %2 = vector.load %arg3[%c0_3, %c0_4] : memref<1x128xf32, #tpu.memory_space<vmem>>, vector<1x128xf32>
    %3 = arith.truncf %0 : vector<16x128xf32> to vector<16x128xbf16>
    %cst = arith.constant dense<0.000000e+00> : vector<16x128xf32>
    %4 = tpu.matmul %3, %1, %cst {dimension_numbers = #tpu.dot_dimension_numbers<[1], [0], [0], [1], [0, 0, 1, 1], [], []>} : vector<16x128xbf16>, vector<128x128xbf16>, vector<16x128xf32> -> vector<16x128xf32>
    %5 = vector.broadcast %2 : vector<1x128xf32> to vector<16x128xf32>
    %6 = arith.addf %4, %5 : vector<16x128xf32>
    %c0_5 = arith.constant 0 : index
    %c0_6 = arith.constant 0 : index
    %7 = vector.load %arg4[%c0_5, %c0_6] : memref<128x128xbf16, #tpu.memory_space<vmem>>, vector<128x128xbf16>
    %c0_7 = arith.constant 0 : index
    %c0_8 = arith.constant 0 : index
    %8 = vector.load %arg5[%c0_7, %c0_8] : memref<1x128xf32, #tpu.memory_space<vmem>>, vector<1x128xf32>
    %9 = arith.truncf %6 : vector<16x128xf32> to vector<16x128xbf16>
    %cst_9 = arith.constant dense<0.000000e+00> : vector<16x128xf32>
    %10 = tpu.matmul %9, %7, %cst_9 {dimension_numbers = #tpu.dot_dimension_numbers<[1], [0], [0], [1], [0, 0, 1, 1], [], []>} : vector<16x128xbf16>, vector<128x128xbf16>, vector<16x128xf32> -> vector<16x128xf32>
    %11 = vector.broadcast %8 : vector<1x128xf32> to vector<16x128xf32>
    %12 = arith.addf %10, %11 : vector<16x128xf32>
    %c0_10 = arith.constant 0 : index
    %c0_11 = arith.constant 0 : index
    %13 = vector.load %arg6[%c0_10, %c0_11] : memref<128x128xbf16, #tpu.memory_space<vmem>>, vector<128x128xbf16>
    %c0_12 = arith.constant 0 : index
    %c0_13 = arith.constant 0 : index
    %14 = vector.load %arg7[%c0_12, %c0_13] : memref<1x128xf32, #tpu.memory_space<vmem>>, vector<1x128xf32>
    %15 = arith.truncf %12 : vector<16x128xf32> to vector<16x128xbf16>
    %cst_14 = arith.constant dense<0.000000e+00> : vector<16x128xf32>
    %16 = tpu.matmul %15, %13, %cst_14 {dimension_numbers = #tpu.dot_dimension_numbers<[1], [0], [0], [1], [0, 0, 1, 1], [], []>} : vector<16x128xbf16>, vector<128x128xbf16>, vector<16x128xf32> -> vector<16x128xf32>
    %17 = vector.broadcast %14 : vector<1x128xf32> to vector<16x128xf32>
    %18 = arith.addf %16, %17 : vector<16x128xf32>
    %c0_15 = arith.constant 0 : index
    %c0_16 = arith.constant 0 : index
    %19 = vector.load %arg8[%c0_15, %c0_16] : memref<16x128xf32, #tpu.memory_space<vmem>>, vector<16x128xf32>
    tpu.vector_store %arg8[%c0_15, %c0_16], %18 {strides = array<i32>} : memref<16x128xf32, #tpu.memory_space<vmem>>, vector<16x128xf32>,
    return
  }
  func.func @transform_0(%arg0: i32) -> (i32, i32) {
    %c0_i32 = arith.constant 0 : i32
    %c0_i32_0 = arith.constant 0 : i32
    return %arg0, %c0_i32 : i32, i32
  }
  func.func @transform_1(%arg0: i32) -> (i32, i32) {
    %c0_i32 = arith.constant 0 : i32
    %c0_i32_0 = arith.constant 0 : i32
    %c0_i32_1 = arith.constant 0 : i32
    return %c0_i32, %c0_i32_0 : i32, i32
  }
  func.func @transform_2(%arg0: i32) -> (i32, i32) {
    %c0_i32 = arith.constant 0 : i32
    %c0_i32_0 = arith.constant 0 : i32
    %c0_i32_1 = arith.constant 0 : i32
    return %c0_i32, %c0_i32_0 : i32, i32
  }
  func.func @transform_3(%arg0: i32) -> (i32, i32) {
    %c0_i32 = arith.constant 0 : i32
    %c0_i32_0 = arith.constant 0 : i32
    %c0_i32_1 = arith.constant 0 : i32
    return %c0_i32, %c0_i32_0 : i32, i32
  }
  func.func @transform_4(%arg0: i32) -> (i32, i32) {
    %c0_i32 = arith.constant 0 : i32
    %c0_i32_0 = arith.constant 0 : i32
    %c0_i32_1 = arith.constant 0 : i32
    return %c0_i32, %c0_i32_0 : i32, i32
  }
  func.func @transform_5(%arg0: i32) -> (i32, i32) {
    %c0_i32 = arith.constant 0 : i32
    %c0_i32_0 = arith.constant 0 : i32
    %c0_i32_1 = arith.constant 0 : i32
    return %c0_i32, %c0_i32_0 : i32, i32
  }
  func.func @transform_6(%arg0: i32) -> (i32, i32) {
    %c0_i32 = arith.constant 0 : i32
    %c0_i32_0 = arith.constant 0 : i32
    %c0_i32_1 = arith.constant 0 : i32
    return %c0_i32, %c0_i32_0 : i32, i32
  }
  func.func @transform_7(%arg0: i32) -> (i32, i32) {
    %c0_i32 = arith.constant 0 : i32
    %c0_i32_0 = arith.constant 0 : i32
    return %arg0, %c0_i32 : i32, i32
  }
}

</mosaic_0001>

<llo_original>
// kernel: tpu_custom_call.1
$region0: #{tpu_custom_call.1}
  #allocation0 [shape = 'u32[]', space=smem, size = 0x4, offset = 0x4, fixed_abs, tag = 'smem constant byte address 0x4 - core index']
  #allocation1 [shape = 'u32[144,128]{1,0:T(1,128)}', space=vmem, size = 0x12000, scoped, tag = 'internal scratch']
  %s0 = inlined_call_operand.hbm [shape: f32[16,128], index: 0, kind: input, shape index: {}]
  %s1 = inlined_call_operand.hbm [shape: bf16[128,128], index: 1, kind: input, shape index: {}]
  %s2 = inlined_call_operand.vmem [shape: f32[1,128], index: 2, kind: input, shape index: {}]
  %s3 = inlined_call_operand.hbm [shape: bf16[128,128], index: 3, kind: input, shape index: {}]
  %s4 = inlined_call_operand.vmem [shape: f32[1,128], index: 4, kind: input, shape index: {}]
  %s5 = inlined_call_operand.hbm [shape: bf16[128,128], index: 5, kind: input, shape index: {}]
  %s6 = inlined_call_operand.vmem [shape: f32[1,128], index: 6, kind: input, shape index: {}]
  %s7 = inlined_call_operand.hbm [shape: f32[16,128], index: 7, kind: output, shape index: {}]
  %s8 = sld [smem:[#allocation0]]
  $region54: #{tpu_custom_call.1} parent=0
    _
  %s10 = ssub.s32 1, %s8
  %s11 = scalar_select 0, %s10, %s8
  $region1: #{tpu_custom_call.1} parent=0
    #allocation2 [shape = 'u8[8192]{0}', space=vmem, size = 0x2000, scoped, tag = 'input window, operand 0, single buffered']
    #allocation3 [shape = 's32[1]{0}', space=sflag, size = 0x4, scoped, tag = 'scoped memory for tpu_custom_call.1']
    #allocation4 [shape = 's32[1]{0}', space=sflag, size = 0x4, scoped, tag = 'scoped memory for tpu_custom_call.1']
    #allocation5 [shape = 'u8[32768]{0}', space=vmem, size = 0x8000, scoped, tag = 'input window, operand 1, single buffered']
    #allocation6 [shape = 's32[1]{0}', space=sflag, size = 0x4, scoped, tag = 'scoped memory for tpu_custom_call.1']
    #allocation7 [shape = 'u8[32768]{0}', space=vmem, size = 0x8000, scoped, tag = 'input window, operand 3, single buffered']
    #allocation8 [shape = 'u8[32768]{0}', space=vmem, size = 0x8000, scoped, tag = 'input window, operand 5, single buffered']
    #allocation9 [shape = 's32[1]{0}', space=sflag, size = 0x4, scoped, tag = 'scoped memory for tpu_custom_call.1']
    #allocation10 [shape = 'u8[8192]{0}', space=vmem, size = 0x2000, scoped, tag = 'output window, operand 0, single buffered']
    %12 = vsyncpa [#allocation3], 0
    %13 = vsyncpa [#allocation6], 0
    %14 = vsyncpa [#allocation9], 0
    %15 = vsyncpa [#allocation4], 0
    // Predicated region
    $region2: #{tpu_custom_call.1} parent=1 // pred_check
      _
    $region3: #{tpu_custom_call.1} parent=1 // pred_check_branch
      %17 = sbr.rel (0) target = $region5
    $region4: #{tpu_custom_call.1} parent=1 // pred_region
      %s19 = ssub.s32 256, 256
      %20 = vsyncadd [#allocation3], %s19
      %s21 = sshll.u32 [#allocation2], 4
      %s22 = int_to_ptr.vmem [resolvable:$true] %s21
      %27 = dma.hbm_to_vmem [thread:$0]  %s0, 256, %s22, [#allocation3], 128, 128, 8
    $region5: #{tpu_custom_call.1} parent=1 // pred_fallthru
      _
    // Predicated region
    $region6: #{tpu_custom_call.1} parent=1 // pred_check
      _
    $region7: #{tpu_custom_call.1} parent=1 // pred_check_branch
      %29 = sbr.rel (0) target = $region9
    $region8: #{tpu_custom_call.1} parent=1 // pred_region
      %s31 = ssub.s32 1024, 1024
      %32 = vsyncadd [#allocation6], %s31
      %s33 = sshll.u32 [#allocation5], 4
      %s34 = int_to_ptr.vmem [resolvable:$true] %s33
      %39 = dma.hbm_to_vmem [thread:$0]  %s1, 1024, %s34, [#allocation6], 64, 64, 4
    $region9: #{tpu_custom_call.1} parent=1 // pred_fallthru
      _
    // Predicated region
    $region10: #{tpu_custom_call.1} parent=1 // pred_check
      _
    $region11: #{tpu_custom_call.1} parent=1 // pred_check_branch
      %41 = sbr.rel (0) target = $region13
    $region12: #{tpu_custom_call.1} parent=1 // pred_region
      _
    $region13: #{tpu_custom_call.1} parent=1 // pred_fallthru
      _
    // Predicated region
    $region14: #{tpu_custom_call.1} parent=1 // pred_check
      _
    $region15: #{tpu_custom_call.1} parent=1 // pred_check_branch
      %43 = sbr.rel (0) target = $region17
    $region16: #{tpu_custom_call.1} parent=1 // pred_region
      %s45 = ssub.s32 1024, 1024
      %46 = vsyncadd [#allocation6], %s45
      %s47 = sshll.u32 [#allocation7], 4
      %s48 = int_to_ptr.vmem [resolvable:$true] %s47
      %53 = dma.hbm_to_vmem [thread:$0]  %s3, 1024, %s48, [#allocation6], 64, 64, 4
    $region17: #{tpu_custom_call.1} parent=1 // pred_fallthru
      _
    // Predicated region
    $region18: #{tpu_custom_call.1} parent=1 // pred_check
      _
    $region19: #{tpu_custom_call.1} parent=1 // pred_check_branch
      %55 = sbr.rel (0) target = $region21
    $region20: #{tpu_custom_call.1} parent=1 // pred_region
      _
    $region21: #{tpu_custom_call.1} parent=1 // pred_fallthru
      _
    // Predicated region
    $region22: #{tpu_custom_call.1} parent=1 // pred_check
      _
    $region23: #{tpu_custom_call.1} parent=1 // pred_check_branch
      %57 = sbr.rel (0) target = $region25
    $region24: #{tpu_custom_call.1} parent=1 // pred_region
      %s59 = ssub.s32 1024, 1024
      %60 = vsyncadd [#allocation9], %s59
      %s61 = sshll.u32 [#allocation8], 4
      %s62 = int_to_ptr.vmem [resolvable:$true] %s61
      %67 = dma.hbm_to_vmem [thread:$0]  %s5, 1024, %s62, [#allocation9], 64, 64, 4
    $region25: #{tpu_custom_call.1} parent=1 // pred_fallthru
      _
    // Predicated region
    $region26: #{tpu_custom_call.1} parent=1 // pred_check
      _
    $region27: #{tpu_custom_call.1} parent=1 // pred_check_branch
      %69 = sbr.rel (0) target = $region29
    $region28: #{tpu_custom_call.1} parent=1 // pred_region
      _
    $region29: #{tpu_custom_call.1} parent=1 // pred_fallthru
      _
    // Predicated region
    $region30: #{tpu_custom_call.1} parent=1 // pred_check
      _
    $region31: #{tpu_custom_call.1} parent=1 // pred_check_branch
      %71 = sbr.rel (0) target = $region33
    $region32: #{tpu_custom_call.1} parent=1 // pred_region
      %72 = dma.done [#allocation3], 256
    $region33: #{tpu_custom_call.1} parent=1 // pred_fallthru
      _
    // Predicated region
    $region34: #{tpu_custom_call.1} parent=1 // pred_check
      _
    $region35: #{tpu_custom_call.1} parent=1 // pred_check_branch
      %74 = sbr.rel (0) target = $region37
    $region36: #{tpu_custom_call.1} parent=1 // pred_region
      %75 = dma.done [#allocation6], 1024
    $region37: #{tpu_custom_call.1} parent=1 // pred_fallthru
      _
    // Predicated region
    $region38: #{tpu_custom_call.1} parent=1 // pred_check
      _
    $region39: #{tpu_custom_call.1} parent=1 // pred_check_branch
      %77 = sbr.rel (0) target = $region41
    $region40: #{tpu_custom_call.1} parent=1 // pred_region
      %78 = dma.done [#allocation6], 1024
    $region41: #{tpu_custom_call.1} parent=1 // pred_fallthru
      _
    // Predicated region
    $region42: #{tpu_custom_call.1} parent=1 // pred_check
      _
    $region43: #{tpu_custom_call.1} parent=1 // pred_check_branch
      %80 = sbr.rel (0) target = $region45
    $region44: #{tpu_custom_call.1} parent=1 // pred_region
      %81 = dma.done [#allocation9], 1024
    $region45: #{tpu_custom_call.1} parent=1 // pred_fallthru
      _
    %v83 = vld [vmem:[#allocation2] sm:$0xff]
    %v84 = vld [vmem:[#allocation2 + $0x8] sm:$0xff]
    %v85 = vld [vmem:[#allocation5] sm:$0xf]
    %v86 = vld [vmem:[#allocation5 + $0x4] sm:$0xf]
    %v87 = vld [vmem:[#allocation5 + $0x8] sm:$0xf]
    %v88 = vld [vmem:[#allocation5 + $0xc] sm:$0xf]
    %v89 = vld [vmem:[#allocation5 + $0x10] sm:$0xf]
    %v90 = vld [vmem:[#allocation5 + $0x14] sm:$0xf]
    %v91 = vld [vmem:[#allocation5 + $0x18] sm:$0xf]
    %v92 = vld [vmem:[#allocation5 + $0x1c] sm:$0xf]
    %v93 = vld [vmem:[#allocation5 + $0x20] sm:$0xf]
    %v94 = vld [vmem:[#allocation5 + $0x24] sm:$0xf]
    %v95 = vld [vmem:[#allocation5 + $0x28] sm:$0xf]
    %v96 = vld [vmem:[#allocation5 + $0x2c] sm:$0xf]
    %v97 = vld [vmem:[#allocation5 + $0x30] sm:$0xf]
    %v98 = vld [vmem:[#allocation5 + $0x34] sm:$0xf]
    %v99 = vld [vmem:[#allocation5 + $0x38] sm:$0xf]
    %v100 = vld [vmem:[#allocation5 + $0x3c] sm:$0xf]
    %v101 = vld [vmem:[%s2] sm:$0x1]
    %v102 = vpack.c.bf16 %v84, %v83
    %v104 = vlaneseq
    %v105 = vshrl.u32 %v104, 7
    %v106 = vsub.s32 0, %v105
    %v107 = vrot.slane %v101, %v106
    %v125 = vunpack.c.l.b16 %v85
    %v126 = vunpack.c.l.b16 %v86
    %v127 = vunpack.c.l.b16 %v87
    %v128 = vunpack.c.l.b16 %v88
    %v129 = vunpack.c.l.b16 %v89
    %v130 = vunpack.c.l.b16 %v90
    %v131 = vunpack.c.l.b16 %v91
    %v132 = vunpack.c.l.b16 %v92
    %v133 = vunpack.c.l.b16 %v93
    %v134 = vunpack.c.l.b16 %v94
    %v135 = vunpack.c.l.b16 %v95
    %v136 = vunpack.c.l.b16 %v96
    %v137 = vunpack.c.l.b16 %v97
    %v138 = vunpack.c.l.b16 %v98
    %v139 = vunpack.c.l.b16 %v99
    %v140 = vunpack.c.l.b16 %v100
    %v141 = vpack.c.b16 %v126, %v125
    %v142 = vpack.c.b16 %v128, %v127
    %v143 = vpack.c.b16 %v130, %v129
    %v144 = vpack.c.b16 %v132, %v131
    %v145 = vpack.c.b16 %v134, %v133
    %v146 = vpack.c.b16 %v136, %v135
    %v147 = vpack.c.b16 %v138, %v137
    %v148 = vpack.c.b16 %v140, %v139
    %157 = vmatprep.subr.bf16.mxu0 0
    %158 = vmatpush1.bf16.msra.mxu0 %v141
    %159 = vmatprep.subr.bf16.mxu0 0
    %160 = vmatpush1.bf16.msra.mxu0 %v142
    %161 = vmatprep.subr.bf16.mxu0 0
    %162 = vmatpush1.bf16.msra.mxu0 %v143
    %163 = vmatprep.subr.bf16.mxu0 0
    %164 = vmatpush1.bf16.msra.mxu0 %v144
    %165 = vmatprep.subr.bf16.mxu0 0
    %166 = vmatpush1.bf16.msra.mxu0 %v145
    %167 = vmatprep.subr.bf16.mxu0 0
    %168 = vmatpush1.bf16.msra.mxu0 %v146
    %169 = vmatprep.subr.bf16.mxu0 0
    %170 = vmatpush1.bf16.msra.mxu0 %v147
    %171 = vmatprep.subr.bf16.mxu0 0
    %172 = vmatpush1.bf16.msra.mxu0 %v148
    %173 = vmatprep.subr.bf16.mxu0 0
    %174 = vmatpush1.bf16.msra.mxu0 0
    %175 = vmatprep.subr.bf16.mxu0 0
    %176 = vmatpush1.bf16.msra.mxu0 0
    %177 = vmatprep.subr.bf16.mxu0 0
    %178 = vmatpush1.bf16.msra.mxu0 0
    %179 = vmatprep.subr.bf16.mxu0 0
    %180 = vmatpush1.bf16.msra.mxu0 0
    %181 = vmatprep.subr.bf16.mxu0 0
    %182 = vmatpush1.bf16.msra.mxu0 0
    %183 = vmatprep.subr.bf16.mxu0 0
    %184 = vmatpush1.bf16.msra.mxu0 0
    %185 = vmatprep.subr.bf16.mxu0 0
    %186 = vmatpush1.bf16.msra.mxu0 0
    %187 = vmatprep.subr.bf16.mxu0 0
    %188 = vmatpush1.bf16.msra.mxu0 0
    %189 = vmatprep.mubr.bf16.mxu0 0
    %190 = vmatmul.mubr.bf16.gmra.mrb[0].mxu0 %v102
    %v191 = vpop.f32.mrb[0].mxu0
    %v192 = vadd.f32 %v107, %v191
    %v193 = vpop.f32.mrb[0].mxu0
    %v194 = vpop.f32.mrb[0].mxu0
    %v195 = vadd.f32 %v107, %v194
    %v196 = vpop.f32.mrb[0].mxu0
    %197 = vdwg.mxu0
    %v198 = vld [vmem:[#allocation7] sm:$0xf]
    %v199 = vld [vmem:[#allocation7 + $0x4] sm:$0xf]
    %v200 = vld [vmem:[#allocation7 + $0x8] sm:$0xf]
    %v201 = vld [vmem:[#allocation7 + $0xc] sm:$0xf]
    %v202 = vld [vmem:[#allocation7 + $0x10] sm:$0xf]
    %v203 = vld [vmem:[#allocation7 + $0x14] sm:$0xf]
    %v204 = vld [vmem:[#allocation7 + $0x18] sm:$0xf]
    %v205 = vld [vmem:[#allocation7 + $0x1c] sm:$0xf]
    %v206 = vld [vmem:[#allocation7 + $0x20] sm:$0xf]
    %v207 = vld [vmem:[#allocation7 + $0x24] sm:$0xf]
    %v208 = vld [vmem:[#allocation7 + $0x28] sm:$0xf]
    %v209 = vld [vmem:[#allocation7 + $0x2c] sm:$0xf]
    %v210 = vld [vmem:[#allocation7 + $0x30] sm:$0xf]
    %v211 = vld [vmem:[#allocation7 + $0x34] sm:$0xf]
    %v212 = vld [vmem:[#allocation7 + $0x38] sm:$0xf]
    %v213 = vld [vmem:[#allocation7 + $0x3c] sm:$0xf]
    %v214 = vld [vmem:[%s4] sm:$0x1]
    %v215 = vpack.c.bf16 %v195, %v192
    %v217 = vlaneseq
    %v218 = vshrl.u32 %v217, 7
    %v219 = vsub.s32 0, %v218
    %v220 = vrot.slane %v214, %v219
    %v238 = vunpack.c.l.b16 %v198
    %v239 = vunpack.c.l.b16 %v199
    %v240 = vunpack.c.l.b16 %v200
    %v241 = vunpack.c.l.b16 %v201
    %v242 = vunpack.c.l.b16 %v202
    %v243 = vunpack.c.l.b16 %v203
    %v244 = vunpack.c.l.b16 %v204
    %v245 = vunpack.c.l.b16 %v205
    %v246 = vunpack.c.l.b16 %v206
    %v247 = vunpack.c.l.b16 %v207
    %v248 = vunpack.c.l.b16 %v208
    %v249 = vunpack.c.l.b16 %v209
    %v250 = vunpack.c.l.b16 %v210
    %v251 = vunpack.c.l.b16 %v211
    %v252 = vunpack.c.l.b16 %v212
    %v253 = vunpack.c.l.b16 %v213
    %v254 = vpack.c.b16 %v239, %v238
    %v255 = vpack.c.b16 %v241, %v240
    %v256 = vpack.c.b16 %v243, %v242
    %v257 = vpack.c.b16 %v245, %v244
    %v258 = vpack.c.b16 %v247, %v246
    %v259 = vpack.c.b16 %v249, %v248
    %v260 = vpack.c.b16 %v251, %v250
    %v261 = vpack.c.b16 %v253, %v252
    %270 = vmatprep.subr.bf16.mxu0 0
    %271 = vmatpush1.bf16.msra.mxu0 %v254
    %272 = vmatprep.subr.bf16.mxu0 0
    %273 = vmatpush1.bf16.msra.mxu0 %v255
    %274 = vmatprep.subr.bf16.mxu0 0
    %275 = vmatpush1.bf16.msra.mxu0 %v256
    %276 = vmatprep.subr.bf16.mxu0 0
    %277 = vmatpush1.bf16.msra.mxu0 %v257
    %278 = vmatprep.subr.bf16.mxu0 0
    %279 = vmatpush1.bf16.msra.mxu0 %v258
    %280 = vmatprep.subr.bf16.mxu0 0
    %281 = vmatpush1.bf16.msra.mxu0 %v259
    %282 = vmatprep.subr.bf16.mxu0 0
    %283 = vmatpush1.bf16.msra.mxu0 %v260
    %284 = vmatprep.subr.bf16.mxu0 0
    %285 = vmatpush1.bf16.msra.mxu0 %v261
    %286 = vmatprep.subr.bf16.mxu0 0
    %287 = vmatpush1.bf16.msra.mxu0 0
    %288 = vmatprep.subr.bf16.mxu0 0
    %289 = vmatpush1.bf16.msra.mxu0 0
    %290 = vmatprep.subr.bf16.mxu0 0
    %291 = vmatpush1.bf16.msra.mxu0 0
    %292 = vmatprep.subr.bf16.mxu0 0
    %293 = vmatpush1.bf16.msra.mxu0 0
    %294 = vmatprep.subr.bf16.mxu0 0
    %295 = vmatpush1.bf16.msra.mxu0 0
    %296 = vmatprep.subr.bf16.mxu0 0
    %297 = vmatpush1.bf16.msra.mxu0 0
    %298 = vmatprep.subr.bf16.mxu0 0
    %299 = vmatpush1.bf16.msra.mxu0 0
    %300 = vmatprep.subr.bf16.mxu0 0
    %301 = vmatpush1.bf16.msra.mxu0 0
    %302 = vmatprep.mubr.bf16.mxu0 0
    %303 = vmatmul.mubr.bf16.gmra.mrb[0].mxu0 %v215
    %v304 = vpop.f32.mrb[0].mxu0
    %v305 = vadd.f32 %v220, %v304
    %v306 = vpop.f32.mrb[0].mxu0
    %v307 = vpop.f32.mrb[0].mxu0
    %v308 = vadd.f32 %v220, %v307
    %v309 = vpop.f32.mrb[0].mxu0
    %310 = vdwg.mxu0
    %v311 = vld [vmem:[#allocation8] sm:$0xf]
    %v312 = vld [vmem:[#allocation8 + $0x4] sm:$0xf]
    %v313 = vld [vmem:[#allocation8 + $0x8] sm:$0xf]
    %v314 = vld [vmem:[#allocation8 + $0xc] sm:$0xf]
    %v315 = vld [vmem:[#allocation8 + $0x10] sm:$0xf]
    %v316 = vld [vmem:[#allocation8 + $0x14] sm:$0xf]
    %v317 = vld [vmem:[#allocation8 + $0x18] sm:$0xf]
    %v318 = vld [vmem:[#allocation8 + $0x1c] sm:$0xf]
    %v319 = vld [vmem:[#allocation8 + $0x20] sm:$0xf]
    %v320 = vld [vmem:[#allocation8 + $0x24] sm:$0xf]
    %v321 = vld [vmem:[#allocation8 + $0x28] sm:$0xf]
    %v322 = vld [vmem:[#allocation8 + $0x2c] sm:$0xf]
    %v323 = vld [vmem:[#allocation8 + $0x30] sm:$0xf]
    %v324 = vld [vmem:[#allocation8 + $0x34] sm:$0xf]
    %v325 = vld [vmem:[#allocation8 + $0x38] sm:$0xf]
    %v326 = vld [vmem:[#allocation8 + $0x3c] sm:$0xf]
    %v327 = vld [vmem:[%s6] sm:$0x1]
    %v328 = vpack.c.bf16 %v308, %v305
    %v330 = vlaneseq
    %v331 = vshrl.u32 %v330, 7
    %v332 = vsub.s32 0, %v331
    %v333 = vrot.slane %v327, %v332
    %v351 = vunpack.c.l.b16 %v311
    %v352 = vunpack.c.l.b16 %v312
    %v353 = vunpack.c.l.b16 %v313
    %v354 = vunpack.c.l.b16 %v314
    %v355 = vunpack.c.l.b16 %v315
    %v356 = vunpack.c.l.b16 %v316
    %v357 = vunpack.c.l.b16 %v317
    %v358 = vunpack.c.l.b16 %v318
    %v359 = vunpack.c.l.b16 %v319
    %v360 = vunpack.c.l.b16 %v320
    %v361 = vunpack.c.l.b16 %v321
    %v362 = vunpack.c.l.b16 %v322
    %v363 = vunpack.c.l.b16 %v323
    %v364 = vunpack.c.l.b16 %v324
    %v365 = vunpack.c.l.b16 %v325
    %v366 = vunpack.c.l.b16 %v326
    %v367 = vpack.c.b16 %v352, %v351
    %v368 = vpack.c.b16 %v354, %v353
    %v369 = vpack.c.b16 %v356, %v355
    %v370 = vpack.c.b16 %v358, %v357
    %v371 = vpack.c.b16 %v360, %v359
    %v372 = vpack.c.b16 %v362, %v361
    %v373 = vpack.c.b16 %v364, %v363
    %v374 = vpack.c.b16 %v366, %v365
    %383 = vmatprep.subr.bf16.mxu0 0
    %384 = vmatpush1.bf16.msra.mxu0 %v367
    %385 = vmatprep.subr.bf16.mxu0 0
    %386 = vmatpush1.bf16.msra.mxu0 %v368
    %387 = vmatprep.subr.bf16.mxu0 0
    %388 = vmatpush1.bf16.msra.mxu0 %v369
    %389 = vmatprep.subr.bf16.mxu0 0
    %390 = vmatpush1.bf16.msra.mxu0 %v370
    %391 = vmatprep.subr.bf16.mxu0 0
    %392 = vmatpush1.bf16.msra.mxu0 %v371
    %393 = vmatprep.subr.bf16.mxu0 0
    %394 = vmatpush1.bf16.msra.mxu0 %v372
    %395 = vmatprep.subr.bf16.mxu0 0
    %396 = vmatpush1.bf16.msra.mxu0 %v373
    %397 = vmatprep.subr.bf16.mxu0 0
    %398 = vmatpush1.bf16.msra.mxu0 %v374
    %399 = vmatprep.subr.bf16.mxu0 0
    %400 = vmatpush1.bf16.msra.mxu0 0
    %401 = vmatprep.subr.bf16.mxu0 0
    %402 = vmatpush1.bf16.msra.mxu0 0
    %403 = vmatprep.subr.bf16.mxu0 0
    %404 = vmatpush1.bf16.msra.mxu0 0
    %405 = vmatprep.subr.bf16.mxu0 0
    %406 = vmatpush1.bf16.msra.mxu0 0
    %407 = vmatprep.subr.bf16.mxu0 0
    %408 = vmatpush1.bf16.msra.mxu0 0
    %409 = vmatprep.subr.bf16.mxu0 0
    %410 = vmatpush1.bf16.msra.mxu0 0
    %411 = vmatprep.subr.bf16.mxu0 0
    %412 = vmatpush1.bf16.msra.mxu0 0
    %413 = vmatprep.subr.bf16.mxu0 0
    %414 = vmatpush1.bf16.msra.mxu0 0
    %415 = vmatprep.mubr.bf16.mxu0 0
    %416 = vmatmul.mubr.bf16.gmra.mrb[0].mxu0 %v328
    %v417 = vpop.f32.mrb[0].mxu0
    %v418 = vadd.f32 %v333, %v417
    %v419 = vpop.f32.mrb[0].mxu0
    %v420 = vpop.f32.mrb[0].mxu0
    %v421 = vadd.f32 %v333, %v420
    %v422 = vpop.f32.mrb[0].mxu0
    %423 = vdwg.mxu0
    %424 = vst [vmem:[#allocation10] sm:$0xff] %v418
    %425 = vst [vmem:[#allocation10 + $0x8] sm:$0xff] %v421
    // Predicated region
    $region46: #{tpu_custom_call.1} parent=1 // pred_check
      _
    $region47: #{tpu_custom_call.1} parent=1 // pred_check_branch
      %427 = sbr.rel (0) target = $region49
    $region48: #{tpu_custom_call.1} parent=1 // pred_region
      %s429 = ssub.s32 256, 256
      %430 = vsyncadd [#allocation4], %s429
      %s431 = sshll.u32 [#allocation10], 4
      %s432 = int_to_ptr.vmem [resolvable:$true] %s431
      %437 = dma.vmem_to_hbm [thread:$0]  %s432, 256, %s7, [#allocation4], 128, 128, 8
    $region49: #{tpu_custom_call.1} parent=1 // pred_fallthru
      _
    // Predicated region
    $region50: #{tpu_custom_call.1} parent=1 // pred_check
      _
    $region51: #{tpu_custom_call.1} parent=1 // pred_check_branch
      %439 = sbr.rel (0) target = $region53
    $region52: #{tpu_custom_call.1} parent=1 // pred_region
      %440 = dma.done [#allocation4], 256
    $region53: #{tpu_custom_call.1} parent=1 // pred_fallthru
      _
    %441 = vsyncpa [#allocation3], 1
    %442 = vsyncpa [#allocation6], 1
    %443 = vsyncpa [#allocation9], 1
    %444 = vsyncpa [#allocation4], 1

</llo_original>
